<compile_context>
chip_gen: v7x
topology: tpu7x:2x2x1
jax: 0.10.0
libtpu: 0.0.40
codegen_flags: <defaults>
</compile_context>

<pallas_src>
import functools

import jax
import jax.numpy as jnp
from jax import lax
from jax.experimental import pallas as pl
from jax.experimental.pallas import tpu as pltpu

_VMEM_LIMIT = 48 * 1024 * 1024   # below v7x's 64 MiB physical, above all default scoped limits


def _round_up(x, m):
    return (x + m - 1) // m * m


# --------------------------------------------------------------------------------------
# Pallas kernel 1: fused multi-layer shared MLP
#   chain of  y = act((x @ w) * scale + bias), weights resident in VMEM, bf16 MXU ops
# --------------------------------------------------------------------------------------
def _fused_mlp_kernel(x_ref, *refs, n_layers, act):
    o_ref = refs[3 * n_layers]
    h = x_ref[...]                                      # bf16 [TM, K]
    for l in range(n_layers):
        w = refs[3 * l][...]                            # bf16 [K, C]
        s = refs[3 * l + 1][...]                        # f32  [1, C]
        b = refs[3 * l + 2][...]                        # f32  [1, C]
        y = jnp.dot(h, w, preferred_element_type=jnp.float32)
        y = y * s + b
        if act == "relu":
            y = jnp.maximum(y, 0.0)
        elif act == "leaky_relu":
            y = jnp.where(y > 0.0, y, 0.1 * y)
        h = y if l == n_layers - 1 else y.astype(jnp.bfloat16)
    o_ref[...] = h


def fused_mlp(x, layers, act="relu"):
    """Apply a chain of (1x1 conv + folded BN + act) layers in ONE pallas_call. x: [M, K]."""
    M, K = x.shape
    TM = 256 if M > 256 else _round_up(M, 8)            # 256-row tiles feed the 256x256 MXU
    Mp = _round_up(M, TM)
    xp = jnp.pad(x, ((0, Mp - M), (0, 0))).astype(jnp.bfloat16)
    n_layers = len(layers)
    Cout = layers[-1]["w"].shape[1]

    args = [xp]
    in_specs = [pl.BlockSpec((TM, K), lambda i: (i, 0))]
    for layer in layers:
        kin, kout = layer["w"].shape
        args += [layer["w"].astype(jnp.bfloat16),
                 layer["scale"].reshape(1, kout).astype(jnp.float32),
                 layer["bias"].reshape(1, kout).astype(jnp.float32)]
        in_specs += [pl.BlockSpec((kin, kout), lambda i: (0, 0)),
                     pl.BlockSpec((1, kout), lambda i: (0, 0)),
                     pl.BlockSpec((1, kout), lambda i: (0, 0))]

    out = pl.pallas_call(
        functools.partial(_fused_mlp_kernel, n_layers=n_layers, act=act),
        out_shape=jax.ShapeDtypeStruct((Mp, Cout), jnp.float32),
        grid=(Mp // TM,),
        in_specs=in_specs,
        out_specs=pl.BlockSpec((TM, Cout), lambda i: (i, 0)),
        compiler_params=pltpu.CompilerParams(
            dimension_semantics=("parallel",),
            vmem_limit_bytes=_VMEM_LIMIT),
    )(*args)
    return out[:M]


def shared_mlp_apply(layers, feats):
    """SharedMLP (sequence of 1x1 Conv1d + BN + ReLU) fused in one kernel. feats: [B,N,C]."""
    B, N, C = feats.shape
    return fused_mlp(feats.reshape(B * N, C), layers, act="relu").reshape(B, N, -1)


# --------------------------------------------------------------------------------------
# Pallas kernel 2: 3x3x3 Conv3d (+ folded BN + LeakyReLU(0.1)) as 27 accumulated
# shifted-window matmuls over the flattened zero-padded voxel grid (no HBM im2col).
# Output is computed on the padded grid (slight overcompute) so every tap is a
# contiguous row window: row p + off_t with off_t = dx*Rp^2 + dy*Rp + dz.
# --------------------------------------------------------------------------------------
def _conv3d_kernel(vox_ref, w_ref, s_ref, b_ref, o_ref, *, offsets, tr):
    r = pl.program_id(1)
    base = r * tr
    cout = w_ref.shape[2]
    acc = jnp.zeros((tr, cout), jnp.float32)
    for t, off in enumerate(offsets):                   # 27 taps, unrolled
        x = vox_ref[0, pl.ds(base + off, tr), :]        # bf16 [tr, Cin]
        acc = acc + jnp.dot(x, w_ref[t], preferred_element_type=jnp.float32)
    y = acc * s_ref[...] + b_ref[...]
    o_ref[0] = jnp.where(y > 0.0, y, 0.1 * y)           # LeakyReLU(0.1)


def conv3d_bn_lrelu(vox, layer, R):
    """vox: [B, R, R, R, Cin] -> [B, R, R, R, Cout]   (k=3, pad=1 conv + BN + LeakyReLU)."""
    B, _, _, _, Cin = vox.shape
    Cout = layer["w"].shape[-1]
    Rp = R + 2
    Rp3 = Rp ** 3
    max_off = 2 * Rp * Rp + 2 * Rp + 2
    TR = min(1024, _round_up(Rp3, 8))                   # row tile of the output
    Rp3T = _round_up(Rp3, TR)
    RpM = _round_up(Rp3T + max_off, 8)                  # input rows incl. shift margin

    vp = jnp.pad(vox, ((0, 0), (1, 1), (1, 1), (1, 1), (0, 0))).reshape(B, Rp3, Cin)
    vp = jnp.pad(vp, ((0, 0), (0, RpM - Rp3), (0, 0))).astype(jnp.bfloat16)

    w = layer["w"].reshape(27, Cin, Cout).astype(jnp.bfloat16)
    s = layer["scale"].reshape(1, Cout).astype(jnp.float32)
    b = layer["bias"].reshape(1, Cout).astype(jnp.float32)
    offsets = tuple(dx * Rp * Rp + dy * Rp + dz
                    for dx in range(3) for dy in range(3) for dz in range(3))

    out = pl.pallas_call(
        functools.partial(_conv3d_kernel, offsets=offsets, tr=TR),
        out_shape=jax.ShapeDtypeStruct((B, Rp3T, Cout), jnp.float32),
        grid=(B, Rp3T // TR),
        in_specs=[
            pl.BlockSpec((1, RpM, Cin), lambda bb, rr: (bb, 0, 0)),   # resident across row tiles
            pl.BlockSpec((27, Cin, Cout), lambda bb, rr: (0, 0, 0)),  # resident weights
            pl.BlockSpec((1, Cout), lambda bb, rr: (0, 0)),
            pl.BlockSpec((1, Cout), lambda bb, rr: (0, 0)),
        ],
        out_specs=pl.BlockSpec((1, TR, Cout), lambda bb, rr: (bb, rr, 0)),
        compiler_params=pltpu.CompilerParams(
            dimension_semantics=("parallel", "parallel"),
            vmem_limit_bytes=_VMEM_LIMIT),
    )(vp, w, s, b)

    # keep only valid interior positions of the padded output grid
    return out[:, :Rp3, :].reshape(B, Rp, Rp, Rp, Cout)[:, :R, :R, :R, :]


# --------------------------------------------------------------------------------------
# Pallas kernel 3: PointNetFP 3-nearest-neighbour inverse-(squared)-distance interpolation
# Tiled over the query-point dimension; padded centers masked with +inf distance.
# --------------------------------------------------------------------------------------
def _three_nn_kernel(pts_ref, ctrT_ref, feat_ref, o_ref, *, m_valid):
    pts = pts_ref[0]                                    # f32  [TQ, 8]  (cols 3..7 zero)
    ctrT = ctrT_ref[0]                                  # f32  [8, Mp]
    feat = feat_ref[0]                                  # bf16 [Mp, C]
    p2 = jnp.sum(pts * pts, axis=-1, keepdims=True)
    c2 = jnp.sum(ctrT * ctrT, axis=0, keepdims=True)
    d = p2 + c2 - 2.0 * jnp.dot(pts, ctrT, preferred_element_type=jnp.float32)
    d = jnp.maximum(d, 0.0)                             # squared distances [TQ, Mp]
    col = lax.broadcasted_iota(jnp.int32, d.shape, 1)
    d = jnp.where(col < m_valid, d, jnp.float32(1e30))  # mask padded centers directly
    wsel = jnp.zeros_like(d)
    for _ in range(3):                                  # 3 nearest, lowest-index tie-break
        m = jnp.min(d, axis=-1, keepdims=True)
        cand = jnp.where(d == m, col, jnp.int32(2 ** 30))
        amin = jnp.min(cand, axis=-1, keepdims=True)
        pick = col == amin
        wsel = wsel + jnp.where(pick, pl.reciprocal(m + 1e-8, approx=True), 0.0)
        d = jnp.where(pick, jnp.float32(1e30), d)
    denom = jnp.sum(wsel, axis=-1, keepdims=True) + 1e-30
    w = wsel * pl.reciprocal(denom, approx=True)
    o_ref[0] = jnp.dot(w.astype(jnp.bfloat16), feat, preferred_element_type=jnp.float32)


def three_nn_interpolate(points_coords, centers_coords, centers_features):
    """points_coords [B,N,3], centers_coords [B,M,3], centers_features [B,M,C] -> [B,N,C]."""
    B, N, _ = points_coords.shape
    M = centers_coords.shape[1]
    C = centers_features.shape[2]
    TQ = 256 if N > 256 else _round_up(N, 8)
    Npad = _round_up(N, TQ)
    Mp = _round_up(M, 8)

    pts = jnp.zeros((B, Npad, 8), jnp.float32).at[:, :N, :3].set(points_coords)
    ctrT = jnp.zeros((B, 8, Mp), jnp.float32).at[:, :3, :M].set(
        jnp.swapaxes(centers_coords, 1, 2))
    feat = jnp.zeros((B, Mp, C), jnp.bfloat16).at[:, :M, :].set(
        centers_features.astype(jnp.bfloat16))

    out = pl.pallas_call(
        functools.partial(_three_nn_kernel, m_valid=M),
        out_shape=jax.ShapeDtypeStruct((B, Npad, C), jnp.float32),
        grid=(B, Npad // TQ),
        in_specs=[
            pl.BlockSpec((1, TQ, 8), lambda bb, q: (bb, q, 0)),
            pl.BlockSpec((1, 8, Mp), lambda bb, q: (bb, 0, 0)),   # resident across q tiles
            pl.BlockSpec((1, Mp, C), lambda bb, q: (bb, 0, 0)),   # resident across q tiles
        ],
        out_specs=pl.BlockSpec((1, TQ, C), lambda bb, q: (bb, q, 0)),
        compiler_params=pltpu.CompilerParams(
            dimension_semantics=("parallel", "parallel"),
            vmem_limit_bytes=_VMEM_LIMIT),
    )(pts, ctrT, feat)
    return out[:, :N, :]


# --------------------------------------------------------------------------------------
# Module building blocks (JAX glue around the Pallas kernels)
# --------------------------------------------------------------------------------------
def pvconv_apply(p, feats, coords):
    """PVConv: voxelize -> 2x(Conv3d+BN+LeakyReLU) -> SE3d -> devoxelize, + point branch."""
    B, N, Cin = feats.shape
    R = p["resolution"]

    # ---- Voxelization (normalize coords then scatter-mean into R^3 grid) ----
    mean = jnp.mean(coords, axis=1, keepdims=True)
    nc = coords - mean
    radius = jnp.max(jnp.linalg.norm(nc, axis=2, keepdims=True), axis=1, keepdims=True)
    nc = nc / jnp.maximum(radius * 2.0, 1e-8) + 0.5     # normalize=True (eps guard added)
    nc = jnp.clip(nc * R, 0.0, R - 1.0)                 # voxel-space float coords
    vi = jnp.round(nc).astype(jnp.int32)
    flat = vi[..., 0] * R * R + vi[..., 1] * R + vi[..., 2]

    # TODO(synk): data-dependent scatter-mean (avg_voxelize) has no clean Pallas TPU
    # equivalent; implemented with XLA scatter-add.
    def _scatter_mean(f_b, idx_b):
        s = jnp.zeros((R ** 3, Cin), jnp.float32).at[idx_b].add(f_b)
        c = jnp.zeros((R ** 3,), jnp.float32).at[idx_b].add(1.0)
        return s / jnp.maximum(c, 1.0)[:, None]

    vox = jax.vmap(_scatter_mean)(feats, flat).reshape(B, R, R, R, Cin)

    # ---- two Conv3d(k=3,pad=1)+BN(eps=1e-4)+LeakyReLU(0.1), tap-accumulating Pallas kernels ----
    vox = conv3d_bn_lrelu(vox, p["conv1"], R)
    vox = conv3d_bn_lrelu(vox, p["conv2"], R)
    Cout = vox.shape[-1]

    # ---- SE3d: tiny FCs kept in plain XLA (padding to 128 rows would be pure overhead) ----
    pooled = jnp.mean(vox, axis=(1, 2, 3))              # [B, Cout]
    h = jax.nn.relu(pooled @ p["se_w1"])
    gate = jax.nn.sigmoid(h @ p["se_w2"])
    vox = (vox * gate[:, None, None, None, :]).reshape(B, R ** 3, Cout)

    # ---- trilinear devoxelization ----
    # TODO(synk): 8-corner gather kept in XLA (take_along_axis); weights/indices match
    # pvcnn's trilinear_devoxelize forward.
    x, y, z = nc[..., 0], nc[..., 1], nc[..., 2]
    x0, y0, z0 = jnp.floor(x), jnp.floor(y), jnp.floor(z)
    fx, fy, fz = x - x0, y - y0, z - z0
    x0i, y0i, z0i = x0.astype(jnp.int32), y0.astype(jnp.int32), z0.astype(jnp.int32)
    x1i = jnp.minimum(x0i + 1, R - 1)
    y1i = jnp.minimum(y0i + 1, R - 1)
    z1i = jnp.minimum(z0i + 1, R - 1)

    def gat(xi, yi, zi):
        idx = (xi * R * R + yi * R + zi)[..., None]
        return jnp.take_along_axis(vox, idx, axis=1)

    devox = (gat(x0i, y0i, z0i) * ((1 - fx) * (1 - fy) * (1 - fz))[..., None]
             + gat(x0i, y0i, z1i) * ((1 - fx) * (1 - fy) * fz)[..., None]
             + gat(x0i, y1i, z0i) * ((1 - fx) * fy * (1 - fz))[..., None]
             + gat(x0i, y1i, z1i) * ((1 - fx) * fy * fz)[..., None]
             + gat(x1i, y0i, z0i) * (fx * (1 - fy) * (1 - fz))[..., None]
             + gat(x1i, y0i, z1i) * (fx * (1 - fy) * fz)[..., None]
             + gat(x1i, y1i, z0i) * (fx * fy * (1 - fz))[..., None]
             + gat(x1i, y1i, z1i) * (fx * fy * fz)[..., None])

    # ---- point branch (SharedMLP) + fusion ----
    pt = shared_mlp_apply(p["point_mlp"], feats)
    return devox + pt, coords


def fp_layer_apply(layer, points_coords, centers_coords, centers_features, points_features):
    """nn.Sequential(PointNetFPModule, PVConv, ...) of one FP stage."""
    interp = three_nn_interpolate(points_coords, centers_coords, centers_features)
    if points_features is not None:
        feats = jnp.concatenate([interp, points_features], axis=-1)
    else:
        feats = interp
    feats = shared_mlp_apply(layer["fp_mlp"], feats)
    coords = points_coords
    for pv in layer["pvconvs"]:
        feats, coords = pvconv_apply(pv, feats, coords)
    return feats, coords


# --------------------------------------------------------------------------------------
# Deterministic parameter initialization (synthetic weights; BN folded in eval mode)
# --------------------------------------------------------------------------------------
def _linear_init(key, cin, cout):
    return (1.0 / float(cin) ** 0.5) * jax.random.normal(key, (cin, cout), dtype=jnp.float32)


def _conv_bn_params(key, cin, cout, bn_eps, is_bn):
    kw, kb, kg, kbt = jax.random.split(key, 4)
    w = _linear_init(kw, cin, cout)
    conv_b = 0.05 * jax.random.normal(kb, (cout,), dtype=jnp.float32)
    if is_bn:
        gamma = 1.0 + 0.1 * jax.random.normal(kg, (cout,), dtype=jnp.float32)
        beta = 0.05 * jax.random.normal(kbt, (cout,), dtype=jnp.float32)
        s = gamma / jnp.sqrt(1.0 + bn_eps)   # eval-mode BN, running stats (mean=0, var=1)
        b = beta + s * conv_b
    else:
        s = jnp.ones((cout,), jnp.float32)
        b = conv_b
    return {"w": w, "scale": s, "bias": b}


def _pvconv_params(key, cin, cout, resolution, is_bn):
    k1, k2, k3, k4, k5 = jax.random.split(key, 5)
    red = max(cout // 8, 1)                 # SE3d reduction = 8
    return {
        "resolution": resolution,
        "conv1": _conv_bn_params(k1, 27 * cin, cout, 1e-4, is_bn),
        "conv2": _conv_bn_params(k2, 27 * cout, cout, 1e-4, is_bn),
        "se_w1": _linear_init(k3, cout, red),
        "se_w2": _linear_init(k4, red, cout),
        "point_mlp": [_conv_bn_params(k5, cin, cout, 1e-5, is_bn)],
    }


class PVCNN2_FP:
    """JAX/Pallas port of pvcnn.models.prox.pvcnnpp.PVCNN2_FP (forward pass)."""

    def __init__(self, num_classes, extra_feature_channels=6, width_multiplier=1,
                 voxel_resolution_multiplier=1, sa_blocks=None, fp_blocks=None,
                 with_classifier=True, is_bn=True, channels_sa_features=256,
                 sa_in_channels=None, key=None):
        del num_classes, with_classifier, sa_blocks      # unused by the FP-only forward
        if fp_blocks is None:
            self.fp_blocks = [((256, 256), (256, 1, 8)), ((256, 256), (256, 1, 8)),
                              ((256, 128), (128, 2, 16)), ((128, 128, 64), (64, 1, 32))]
        else:
            self.fp_blocks = fp_blocks
        self.in_channels = extra_feature_channels + 3
        sa_in_channels = list(sa_in_channels)
        sa_in_channels[0] = extra_feature_channels
        r, vr = width_multiplier, voxel_resolution_multiplier
        key = jax.random.PRNGKey(0) if key is None else key

        layers = []
        c_in = channels_sa_features
        for fp_idx, (fp_configs, conv_configs) in enumerate(self.fp_blocks):
            key, kmlp = jax.random.split(key)
            out_channels = tuple(int(r * oc) for oc in fp_configs)
            mlp_layers = []
            cc = c_in + sa_in_channels[-1 - fp_idx]
            for oc, kk in zip(out_channels, jax.random.split(kmlp, len(out_channels))):
                mlp_layers.append(_conv_bn_params(kk, cc, oc, 1e-5, is_bn))
                cc = oc
            c_in = out_channels[-1]
            pvconvs = []
            if conv_configs is not None:
                oc, num_blocks, vres = conv_configs
                oc, vres = int(r * oc), int(vr * vres)
                for _ in range(num_blocks):
                    key, kpv = jax.random.split(key)
                    pvconvs.append(_pvconv_params(kpv, c_in, oc, vres, is_bn))
                    c_in = oc
            layers.append({"fp_mlp": mlp_layers, "pvconvs": pvconvs})
        self.fp_layers = layers
        self.out_channels = c_in

    def __call__(self, coords_list, coords, features, in_features_list):
        for fp_idx, layer in enumerate(self.fp_layers):
            features, coords = fp_layer_apply(
                layer, coords_list[-1 - fp_idx], coords, features,
                in_features_list[-1 - fp_idx])
        return features


# --------------------------------------------------------------------------------------
if __name__ == "__main__":
    key = jax.random.PRNGKey(0)
    kparam, kdata = jax.random.split(key)

    B = 2
    extra = 6
    channels_sa_features = 64
    sa_in_channels = [9, 16, 32, 64]       # entry [0] gets overridden to extra_feature_channels
    n_points = [128, 64, 32, 16]           # SA pyramid point counts (dense -> coarse)
    n_final = 8                            # points carried by `coords` / `features`

    model = PVCNN2_FP(num_classes=8, extra_feature_channels=extra,
                      width_multiplier=0.25, voxel_resolution_multiplier=0.5,
                      is_bn=True, channels_sa_features=channels_sa_features,
                      sa_in_channels=sa_in_channels, key=kparam)

    ks = jax.random.split(kdata, 2 + 2 * len(n_points))
    coords_list = tuple(jax.random.normal(ks[i], (B, n, 3), jnp.float32)
                        for i, n in enumerate(n_points))
    feat_channels = [extra] + sa_in_channels[1:]
    in_features_list = tuple(
        jax.random.normal(ks[len(n_points) + i], (B, n, c), jnp.float32)
        for i, (n, c) in enumerate(zip(n_points, feat_channels)))
    coords = jax.random.normal(ks[-2], (B, n_final, 3), jnp.float32)
    features = jax.random.normal(ks[-1], (B, n_final, channels_sa_features), jnp.float32)

    out = model(coords_list, coords, features, in_features_list)
    out = jax.block_until_ready(out)
    assert out.shape == (B, n_points[0], model.out_channels), out.shape
    assert bool(jnp.all(jnp.isfinite(out)))
    print("KERNEL_OK")
</pallas_src>

<mosaic_0001>
module attributes {stable_mosaic.version = 11 : i64} {
  func.func @_three_nn_kernel(%arg0: i32, %arg1: i32, %arg2: memref<1x16x8xf32, #tpu.memory_space<vmem>>, %arg3: memref<1x8x8xf32, #tpu.memory_space<vmem>>, %arg4: memref<1x8x64xbf16, #tpu.memory_space<vmem>>, %arg5: memref<1x16x64xf32, #tpu.memory_space<vmem>>) attributes {dimension_semantics = [#tpu.dimension_semantics<parallel>, #tpu.dimension_semantics<parallel>], iteration_bounds = array<i64: 2, 1>, scalar_prefetch = 0 : i64, scratch_operands = 0 : i64, tpu.core_type = #tpu.core_type<tc>, window_params = [{transform_indices = @transform_0, window_bounds = array<i64: 1, 16, 8>}, {transform_indices = @transform_1, window_bounds = array<i64: 1, 8, 8>}, {transform_indices = @transform_2, window_bounds = array<i64: 1, 8, 64>}, {transform_indices = @transform_3, window_bounds = array<i64: 1, 16, 64>}]} {
    %c0 = arith.constant 0 : index
    %c0_0 = arith.constant 0 : index
    %c0_1 = arith.constant 0 : index
    %0 = vector.load %arg2[%c0, %c0_0, %c0_1] : memref<1x16x8xf32, #tpu.memory_space<vmem>>, vector<1x16x8xf32>
    %1 = vector.shape_cast %0 : vector<1x16x8xf32> to vector<16x8xf32>
    %c0_2 = arith.constant 0 : index
    %c0_3 = arith.constant 0 : index
    %c0_4 = arith.constant 0 : index
    %2 = vector.load %arg3[%c0_2, %c0_3, %c0_4] : memref<1x8x8xf32, #tpu.memory_space<vmem>>, vector<1x8x8xf32>
    %3 = vector.shape_cast %2 : vector<1x8x8xf32> to vector<8x8xf32>
    %c0_5 = arith.constant 0 : index
    %c0_6 = arith.constant 0 : index
    %c0_7 = arith.constant 0 : index
    %4 = vector.load %arg4[%c0_5, %c0_6, %c0_7] : memref<1x8x64xbf16, #tpu.memory_space<vmem>>, vector<1x8x64xbf16>
    %5 = vector.shape_cast %4 : vector<1x8x64xbf16> to vector<8x64xbf16>
    %6 = arith.mulf %1, %1 : vector<16x8xf32>
    %cst = arith.constant dense<0.000000e+00> : vector<16xf32>
    %7 = vector.multi_reduction <add>, %6, %cst [1] : vector<16x8xf32> to vector<16xf32>
    %8 = vector.shape_cast %7 : vector<16xf32> to vector<16x1xf32>
    %9 = arith.mulf %3, %3 : vector<8x8xf32>
    %cst_8 = arith.constant dense<0.000000e+00> : vector<8xf32>
    %10 = vector.multi_reduction <add>, %9, %cst_8 [0] : vector<8x8xf32> to vector<8xf32>
    %11 = vector.shape_cast %10 : vector<8xf32> to vector<1x8xf32>
    %12 = vector.broadcast %8 : vector<16x1xf32> to vector<16x8xf32>
    %13 = vector.broadcast %11 : vector<1x8xf32> to vector<16x8xf32>
    %14 = arith.addf %12, %13 : vector<16x8xf32>
    %cst_9 = arith.constant dense<0.000000e+00> : vector<16x8xf32>
    %15 = tpu.matmul %1, %3, %cst_9 {dimension_numbers = #tpu.dot_dimension_numbers<[1], [0], [0], [1], [0, 0, 1, 1], [], []>} : vector<16x8xf32>, vector<8x8xf32>, vector<16x8xf32> -> vector<16x8xf32>
    %cst_10 = arith.constant 2.000000e+00 : f32
    %16 = vector.broadcast %cst_10 : f32 to vector<16x8xf32>
    %17 = arith.mulf %16, %15 : vector<16x8xf32>
    %18 = arith.subf %14, %17 : vector<16x8xf32>
    %cst_11 = arith.constant 0.000000e+00 : f32
    %19 = vector.broadcast %cst_11 : f32 to vector<16x8xf32>
    %20 = arith.maximumf %18, %19 : vector<16x8xf32>
    %21 = tpu.iota {dimensions = array<i32: 1>} : vector<16x8xi32>
    %c8_i32 = arith.constant 8 : i32
    %22 = vector.broadcast %c8_i32 : i32 to vector<16x8xi32>
    %23 = arith.cmpi slt, %21, %22 : vector<16x8xi32>
    %cst_12 = arith.constant 1.000000e+30 : f32
    %24 = vector.broadcast %cst_12 : f32 to vector<16x8xf32>
    %25 = arith.select %23, %20, %24 : vector<16x8xi1>, vector<16x8xf32>
    %cst_13 = arith.constant 0.000000e+00 : f32
    %26 = vector.broadcast %cst_13 : f32 to vector<16x8xf32>
    %cst_14 = arith.constant dense<0x7F800000> : vector<16xf32>
    %27 = vector.multi_reduction <minimumf>, %25, %cst_14 [1] : vector<16x8xf32> to vector<16xf32>
    %28 = vector.shape_cast %27 : vector<16xf32> to vector<16x1xf32>
    %29 = vector.broadcast %28 : vector<16x1xf32> to vector<16x8xf32>
    %30 = arith.cmpf oeq, %25, %29 : vector<16x8xf32>
    %c1073741824_i32 = arith.constant 1073741824 : i32
    %31 = vector.broadcast %c1073741824_i32 : i32 to vector<16x8xi32>
    %32 = arith.select %30, %21, %31 : vector<16x8xi1>, vector<16x8xi32>
    %cst_15 = arith.constant dense<2147483647> : vector<16xi32>
    %33 = vector.multi_reduction <minsi>, %32, %cst_15 [1] : vector<16x8xi32> to vector<16xi32>
    %34 = vector.shape_cast %33 : vector<16xi32> to vector<16x1xi32>
    %35 = vector.broadcast %34 : vector<16x1xi32> to vector<16x8xi32>
    %36 = arith.cmpi eq, %21, %35 : vector<16x8xi32>
    %cst_16 = arith.constant 9.99999993E-9 : f32
    %37 = vector.broadcast %cst_16 : f32 to vector<16x1xf32>
    %38 = arith.addf %28, %37 : vector<16x1xf32>
    %39 = tpu.reciprocal %38 {approx = true} : vector<16x1xf32> -> vector<16x1xf32>
    %cst_17 = arith.constant 0.000000e+00 : f32
    %40 = vector.shape_cast %39 : vector<16x1xf32> to vector<16x1xf32>
    %41 = vector.broadcast %40 : vector<16x1xf32> to vector<16x8xf32>
    %42 = vector.broadcast %cst_17 : f32 to vector<16x8xf32>
    %43 = arith.select %36, %41, %42 : vector<16x8xi1>, vector<16x8xf32>
    %44 = arith.addf %26, %43 : vector<16x8xf32>
    %cst_18 = arith.constant 1.000000e+30 : f32
    %45 = vector.broadcast %cst_18 : f32 to vector<16x8xf32>
    %46 = arith.select %36, %45, %25 : vector<16x8xi1>, vector<16x8xf32>
    %cst_19 = arith.constant dense<0x7F800000> : vector<16xf32>
    %47 = vector.multi_reduction <minimumf>, %46, %cst_19 [1] : vector<16x8xf32> to vector<16xf32>
    %48 = vector.shape_cast %47 : vector<16xf32> to vector<16x1xf32>
    %49 = vector.broadcast %48 : vector<16x1xf32> to vector<16x8xf32>
    %50 = arith.cmpf oeq, %46, %49 : vector<16x8xf32>
    %c1073741824_i32_20 = arith.constant 1073741824 : i32
    %51 = vector.broadcast %c1073741824_i32_20 : i32 to vector<16x8xi32>
    %52 = arith.select %50, %21, %51 : vector<16x8xi1>, vector<16x8xi32>
    %cst_21 = arith.constant dense<2147483647> : vector<16xi32>
    %53 = vector.multi_reduction <minsi>, %52, %cst_21 [1] : vector<16x8xi32> to vector<16xi32>
    %54 = vector.shape_cast %53 : vector<16xi32> to vector<16x1xi32>
    %55 = vector.broadcast %54 : vector<16x1xi32> to vector<16x8xi32>
    %56 = arith.cmpi eq, %21, %55 : vector<16x8xi32>
    %cst_22 = arith.constant 9.99999993E-9 : f32
    %57 = vector.broadcast %cst_22 : f32 to vector<16x1xf32>
    %58 = arith.addf %48, %57 : vector<16x1xf32>
    %59 = tpu.reciprocal %58 {approx = true} : vector<16x1xf32> -> vector<16x1xf32>
    %cst_23 = arith.constant 0.000000e+00 : f32
    %60 = vector.shape_cast %59 : vector<16x1xf32> to vector<16x1xf32>
    %61 = vector.broadcast %60 : vector<16x1xf32> to vector<16x8xf32>
    %62 = vector.broadcast %cst_23 : f32 to vector<16x8xf32>
    %63 = arith.select %56, %61, %62 : vector<16x8xi1>, vector<16x8xf32>
    %64 = arith.addf %44, %63 : vector<16x8xf32>
    %cst_24 = arith.constant 1.000000e+30 : f32
    %65 = vector.broadcast %cst_24 : f32 to vector<16x8xf32>
    %66 = arith.select %56, %65, %46 : vector<16x8xi1>, vector<16x8xf32>
    %cst_25 = arith.constant dense<0x7F800000> : vector<16xf32>
    %67 = vector.multi_reduction <minimumf>, %66, %cst_25 [1] : vector<16x8xf32> to vector<16xf32>
    %68 = vector.shape_cast %67 : vector<16xf32> to vector<16x1xf32>
    %69 = vector.broadcast %68 : vector<16x1xf32> to vector<16x8xf32>
    %70 = arith.cmpf oeq, %66, %69 : vector<16x8xf32>
    %c1073741824_i32_26 = arith.constant 1073741824 : i32
    %71 = vector.broadcast %c1073741824_i32_26 : i32 to vector<16x8xi32>
    %72 = arith.select %70, %21, %71 : vector<16x8xi1>, vector<16x8xi32>
    %cst_27 = arith.constant dense<2147483647> : vector<16xi32>
    %73 = vector.multi_reduction <minsi>, %72, %cst_27 [1] : vector<16x8xi32> to vector<16xi32>
    %74 = vector.shape_cast %73 : vector<16xi32> to vector<16x1xi32>
    %75 = vector.broadcast %74 : vector<16x1xi32> to vector<16x8xi32>
    %76 = arith.cmpi eq, %21, %75 : vector<16x8xi32>
    %cst_28 = arith.constant 9.99999993E-9 : f32
    %77 = vector.broadcast %cst_28 : f32 to vector<16x1xf32>
    %78 = arith.addf %68, %77 : vector<16x1xf32>
    %79 = tpu.reciprocal %78 {approx = true} : vector<16x1xf32> -> vector<16x1xf32>
    %cst_29 = arith.constant 0.000000e+00 : f32
    %80 = vector.shape_cast %79 : vector<16x1xf32> to vector<16x1xf32>
    %81 = vector.broadcast %80 : vector<16x1xf32> to vector<16x8xf32>
    %82 = vector.broadcast %cst_29 : f32 to vector<16x8xf32>
    %83 = arith.select %76, %81, %82 : vector<16x8xi1>, vector<16x8xf32>
    %84 = arith.addf %64, %83 : vector<16x8xf32>
    %cst_30 = arith.constant dense<0.000000e+00> : vector<16xf32>
    %85 = vector.multi_reduction <add>, %84, %cst_30 [1] : vector<16x8xf32> to vector<16xf32>
    %86 = vector.shape_cast %85 : vector<16xf32> to vector<16x1xf32>
    %cst_31 = arith.constant 1.000000e-30 : f32
    %87 = vector.broadcast %cst_31 : f32 to vector<16x1xf32>
    %88 = arith.addf %86, %87 : vector<16x1xf32>
    %89 = tpu.reciprocal %88 {approx = true} : vector<16x1xf32> -> vector<16x1xf32>
    %90 = vector.broadcast %89 : vector<16x1xf32> to vector<16x8xf32>
    %91 = arith.mulf %84, %90 : vector<16x8xf32>
    %92 = arith.truncf %91 : vector<16x8xf32> to vector<16x8xbf16>
    %cst_32 = arith.constant dense<0.000000e+00> : vector<16x64xf32>
    %93 = tpu.matmul %92, %5, %cst_32 {dimension_numbers = #tpu.dot_dimension_numbers<[1], [0], [0], [1], [0, 0, 1, 1], [], []>} : vector<16x8xbf16>, vector<8x64xbf16>, vector<16x64xf32> -> vector<16x64xf32>
    %c0_33 = arith.constant 0 : index
    %c0_34 = arith.constant 0 : index
    %c0_35 = arith.constant 0 : index
    %94 = vector.load %arg5[%c0_33, %c0_34, %c0_35] : memref<1x16x64xf32, #tpu.memory_space<vmem>>, vector<1x16x64xf32>
    %95 = vector.shape_cast %94 : vector<1x16x64xf32> to vector<16x64xf32>
    %96 = vector.shape_cast %93 : vector<16x64xf32> to vector<1x16x64xf32>
    tpu.vector_store %arg5[%c0_33, %c0_34, %c0_35], %96 {strides = array<i32>} : memref<1x16x64xf32, #tpu.memory_space<vmem>>, vector<1x16x64xf32>,
    return
  }
  func.func @transform_0(%arg0: i32, %arg1: i32) -> (i32, i32, i32) {
    %c0_i32 = arith.constant 0 : i32
    %c0_i32_0 = arith.constant 0 : i32
    return %arg0, %arg1, %c0_i32 : i32, i32, i32
  }
  func.func @transform_1(%arg0: i32, %arg1: i32) -> (i32, i32, i32) {
    %c0_i32 = arith.constant 0 : i32
    %c0_i32_0 = arith.constant 0 : i32
    %c0_i32_1 = arith.constant 0 : i32
    return %arg0, %c0_i32, %c0_i32_0 : i32, i32, i32
  }
  func.func @transform_2(%arg0: i32, %arg1: i32) -> (i32, i32, i32) {
    %c0_i32 = arith.constant 0 : i32
    %c0_i32_0 = arith.constant 0 : i32
    %c0_i32_1 = arith.constant 0 : i32
    return %arg0, %c0_i32, %c0_i32_0 : i32, i32, i32
  }
  func.func @transform_3(%arg0: i32, %arg1: i32) -> (i32, i32, i32) {
    %c0_i32 = arith.constant 0 : i32
    %c0_i32_0 = arith.constant 0 : i32
    return %arg0, %arg1, %c0_i32 : i32, i32, i32
  }
}

</mosaic_0001>

<llo_original>
// kernel: tpu_custom_call.1
$region0: #{tpu_custom_call.1}
  #allocation0 [shape = 'u32[]', space=smem, size = 0x4, offset = 0x4, fixed_abs, tag = 'smem constant byte address 0x4 - core index']
  #allocation1 [shape = 'u32[144,128]{1,0:T(1,128)}', space=vmem, size = 0x12000, scoped, tag = 'internal scratch']
  %s0 = inlined_call_operand.vmem [shape: f32[2,16,8], index: 0, kind: input, shape index: {}]
  %s1 = inlined_call_operand.vmem [shape: f32[2,8,8], index: 1, kind: input, shape index: {}]
  %s2 = inlined_call_operand.vmem [shape: bf16[2,8,64], index: 2, kind: input, shape index: {}]
  %s3 = inlined_call_operand.hbm [shape: f32[2,16,64], index: 3, kind: output, shape index: {}]
  %s4 = sld [smem:[#allocation0]]
  $region45: #{tpu_custom_call.1} parent=0
    _
  %s6 = ssub.s32 1, %s4
  %s7 = scalar_select 0, %s6, %s4
  $region1: #{tpu_custom_call.1} parent=0
    #allocation2 [shape = 'u8[16384]{0}', space=vmem, size = 0x4000, scoped, tag = 'output window, operand 0']
    #allocation3 [shape = 's32[2]{0}', space=sflag, size = 0x8, scoped, tag = 'scoped memory for tpu_custom_call.1']
    %8 = vsyncpa [#allocation3], 0
    %s9 = scalar_lea.sflag [#allocation3], 1
    %10 = vsyncpa %s9, 0
    loop: start=0, step=1, limit=4
    $region2: #{tpu_custom_call.1} parent=1 // loop_pre_header
      _
    $region3: #{tpu_custom_call.1} parent=1 // loop_header
      %s12 = sphi 0, %s16
      %p13 = scmp.ge.s32.totalorder %s12, 4
      %s19 = sphi 0, %s31
      %s20 = sphi 0, %s27
      %s21 = sphi 0, %s19
      %s22 = sphi 0, %s20
      %s23 = sphi 0, %s21
      %s24 = sphi 0, %s22
      %s36 = sphi 0, %s38
      %s39 = sphi 0, %s36
      %s40 = sphi 0, %s39
      %s56 = sphi 0, %s40
      %s62 = sphi 0, %s64
      %s65 = sphi 0, %s62
      %s66 = sphi 0, %s65
      %s82 = sphi 0, %s66
      %s88 = sphi 0, %s90
      %s91 = sphi 0, %s88
      %s92 = sphi 0, %s91
      %s108 = sphi 0, %s92
      %s116 = sphi 0, %s118
      %s119 = sphi 0, %s116
      %s120 = sphi 0, %s119
      %s136 = sphi 0, %s120
    $region4: #{tpu_custom_call.1} parent=1 // loop_header_branch
      %15 = sbr.rel (%p13) target = $region8
    $region5: #{tpu_custom_call.1} parent=1 // loop_body
      %s17 = ssub.s32 %s12, 1
      %s18 = ssub.s32 %s12, 2
      %s25 = sadd.s32 1, %s20
      %p26 = scmp.ge.s32.totalorder %s25, 1
      %s27 = scalar_select %p26, 0, %s25
      %s28 = sadd.s32 1, %s19
      %s29 = scalar_select %p26, %s28, %s19
      %p30 = scmp.ge.s32.totalorder %s29, 2
      %s31 = scalar_select %p30, 0, %s29
      %s32 = ssub.s32 %s19, %s31
      %s33 = ssub.s32 %s20, %s27
      %s34 = sor.u32 %s32, %s33
      %p35 = scmp.eq.s32.totalorder %s34, 0
      %s37 = sadd.s32 %s36, 1
      %s38 = scalar_select %p35, %s36, %s37
      %p41 = pneg %p35
      %p42 = scmp.eq.s32.totalorder %s12, 1
      %p43 = por %p41, %p42
      %p44 = scmp.ne.s32.totalorder %s36, %s39
      %p45 = scmp.eq.s32.totalorder %s12, 0
      %p46 = por %p44, %p45
      %p47 = scmp.ne.s32.totalorder %s36, %s39
      %p48 = scmp.eq.s32.totalorder %s17, 1
      %p49 = por %p47, %p48
      %p50 = scmp.ne.s32.totalorder %s39, %s40
      %p51 = scmp.eq.s32.totalorder %s17, 0
      %p52 = por %p50, %p51
      %p53 = scmp.ne.s32.totalorder %s39, %s40
      %p54 = scmp.eq.s32.totalorder %s18, 1
      %p55 = por %p53, %p54
      %p57 = scmp.ne.s32.totalorder %s40, %s56
      %p58 = scmp.eq.s32.totalorder %s18, 0
      %p59 = por %p57, %p58
      %s60 = ssub.s32 %s19, %s31
      %p61 = scmp.eq.s32.totalorder %s60, 0
      %s63 = sadd.s32 %s62, 1
      %s64 = scalar_select %p61, %s62, %s63
      %p67 = pneg %p61
      %p68 = scmp.eq.s32.totalorder %s12, 1
      %p69 = por %p67, %p68
      %p70 = scmp.ne.s32.totalorder %s62, %s65
      %p71 = scmp.eq.s32.totalorder %s12, 0
      %p72 = por %p70, %p71
      %p73 = scmp.ne.s32.totalorder %s62, %s65
      %p74 = scmp.eq.s32.totalorder %s17, 1
      %p75 = por %p73, %p74
      %p76 = scmp.ne.s32.totalorder %s65, %s66
      %p77 = scmp.eq.s32.totalorder %s17, 0
      %p78 = por %p76, %p77
      %p79 = scmp.ne.s32.totalorder %s65, %s66
      %p80 = scmp.eq.s32.totalorder %s18, 1
      %p81 = por %p79, %p80
      %p83 = scmp.ne.s32.totalorder %s66, %s82
      %p84 = scmp.eq.s32.totalorder %s18, 0
      %p85 = por %p83, %p84
      %s86 = ssub.s32 %s19, %s31
      %p87 = scmp.eq.s32.totalorder %s86, 0
      %s89 = sadd.s32 %s88, 1
      %s90 = scalar_select %p87, %s88, %s89
      %p93 = pneg %p87
      %p94 = scmp.eq.s32.totalorder %s12, 1
      %p95 = por %p93, %p94
      %p96 = scmp.ne.s32.totalorder %s88, %s91
      %p97 = scmp.eq.s32.totalorder %s12, 0
      %p98 = por %p96, %p97
      %p99 = scmp.ne.s32.totalorder %s88, %s91
      %p100 = scmp.eq.s32.totalorder %s17, 1
      %p101 = por %p99, %p100
      %p102 = scmp.ne.s32.totalorder %s91, %s92
      %p103 = scmp.eq.s32.totalorder %s17, 0
      %p104 = por %p102, %p103
      %p105 = scmp.ne.s32.totalorder %s91, %s92
      %p106 = scmp.eq.s32.totalorder %s18, 1
      %p107 = por %p105, %p106
      %p109 = scmp.ne.s32.totalorder %s92, %s108
      %p110 = scmp.eq.s32.totalorder %s18, 0
      %p111 = por %p109, %p110
      %s112 = ssub.s32 %s19, %s31
      %s113 = ssub.s32 %s20, %s27
      %s114 = sor.u32 %s112, %s113
      %p115 = scmp.eq.s32.totalorder %s114, 0
      %s117 = sadd.s32 %s116, 1
      %s118 = scalar_select %p115, %s116, %s117
      %p121 = pneg %p115
      %p122 = scmp.eq.s32.totalorder %s12, 1
      %p123 = por %p121, %p122
      %p124 = scmp.ne.s32.totalorder %s116, %s119
      %p125 = scmp.eq.s32.totalorder %s12, 0
      %p126 = por %p124, %p125
      %p127 = scmp.ne.s32.totalorder %s116, %s119
      %p128 = scmp.eq.s32.totalorder %s17, 1
      %p129 = por %p127, %p128
      %p130 = scmp.ne.s32.totalorder %s119, %s120
      %p131 = scmp.eq.s32.totalorder %s17, 0
      %p132 = por %p130, %p131
      %p133 = scmp.ne.s32.totalorder %s119, %s120
      %p134 = scmp.eq.s32.totalorder %s18, 1
      %p135 = por %p133, %p134
      %p137 = scmp.ne.s32.totalorder %s120, %s136
      %p138 = scmp.eq.s32.totalorder %s18, 0
      %p139 = por %p137, %p138
      %p140 = scmp.le.s32.totalorder 1, %s12
      %p141 = scmp.lt.s32.totalorder %s12, 3
      %p142 = pnand %p140, %p141
      %p143 = pneg %p142
      // Predicated region
      $region9: #{tpu_custom_call.1} parent=5 // pred_check
        _
      $region10: #{tpu_custom_call.1} parent=5 // pred_check_branch
        %145 = sbr.rel (%p142) target = $region12
      $region11: #{tpu_custom_call.1} parent=5 // pred_region
        %s146 = ssub.s32 %s12, 1
      $region12: #{tpu_custom_call.1} parent=5 // pred_fallthru
        _
      %p147 = scmp.lt.s32.totalorder %s12, 2
      // Predicated region
      $region13: #{tpu_custom_call.1} parent=5 // pred_check
        %p148 = pneg %p147
      $region14: #{tpu_custom_call.1} parent=5 // pred_check_branch
        %150 = sbr.rel (%p148) target = $region16
      $region15: #{tpu_custom_call.1} parent=5 // pred_region
        // Predicated region
        $region17: #{tpu_custom_call.1} parent=15 // pred_check
          %p151 = pneg %p46
        $region18: #{tpu_custom_call.1} parent=15 // pred_check_branch
          %153 = sbr.rel (%p151) target = $region20
        $region19: #{tpu_custom_call.1} parent=15 // pred_region
          %s154 = smul.u32 2, %s20
          %p155 = scmp.lt.s32.totalorder %s19, 1
          %s156 = scalar_select %p155, %s19, 1
          %p157 = scmp.lt.s32.totalorder %s154, 1
          %s158 = scalar_select %p157, %s154, 1
          %s159 = smul.addr %s156, 2
          %s160 = sadd.s32 %s158, %s159
          %s161 = smul.addr %s160, 8
          %s162 = scalar_lea.vmem %s0, %s161
          %s163 = smul.u32 2, %s20
        $region20: #{tpu_custom_call.1} parent=15 // pred_fallthru
          _
        // Predicated region
        $region21: #{tpu_custom_call.1} parent=15 // pred_check
          %p164 = pneg %p72
        $region22: #{tpu_custom_call.1} parent=15 // pred_check_branch
          %166 = sbr.rel (%p164) target = $region24
        $region23: #{tpu_custom_call.1} parent=15 // pred_region
          %p167 = scmp.lt.s32.totalorder %s19, 1
          %s168 = scalar_select %p167, %s19, 1
          %s169 = smul.addr %s168, 8
          %s170 = scalar_lea.vmem %s1, %s169
        $region24: #{tpu_custom_call.1} parent=15 // pred_fallthru
          _
        // Predicated region
        $region25: #{tpu_custom_call.1} parent=15 // pred_check
          %p171 = pneg %p98
        $region26: #{tpu_custom_call.1} parent=15 // pred_check_branch
          %173 = sbr.rel (%p171) target = $region28
        $region27: #{tpu_custom_call.1} parent=15 // pred_region
          %p174 = scmp.lt.s32.totalorder %s19, 1
          %s175 = scalar_select %p174, %s19, 1
          %s176 = smul.addr %s175, 4
          %s177 = scalar_lea.vmem %s2, %s176
        $region28: #{tpu_custom_call.1} parent=15 // pred_fallthru
          _
      $region16: #{tpu_custom_call.1} parent=5 // pred_fallthru
        _
      %p178 = scmp.le.s32.totalorder 1, %s12
      %p179 = scmp.lt.s32.totalorder %s12, 3
      %p180 = pnand %p178, %p179
      %p181 = pneg %p180
      // Predicated region
      $region29: #{tpu_custom_call.1} parent=5 // pred_check
        _
      $region30: #{tpu_custom_call.1} parent=5 // pred_check_branch
        %183 = sbr.rel (%p180) target = $region32
      $region31: #{tpu_custom_call.1} parent=5 // pred_region
        %s184 = ssub.s32 %s12, 1
        %s185 = smul.u32 2, %s22
        %p186 = scmp.lt.s32.totalorder %s21, 1
        %s187 = scalar_select %p186, %s21, 1
        %p188 = scmp.lt.s32.totalorder %s185, 1
        %s189 = scalar_select %p188, %s185, 1
        %s190 = smul.addr %s187, 2
        %s191 = sadd.s32 %s189, %s190
        %s192 = smul.addr %s191, 8
        %s193 = scalar_lea.vmem %s0, %s192
        %p194 = pneg %p52
        %p195 = pneg %p49
        %p196 = scmp.lt.s32.totalorder %s21, 1
        %s197 = scalar_select %p196, %s21, 1
        %s198 = smul.addr %s197, 8
        %s199 = scalar_lea.vmem %s1, %s198
        %p200 = pneg %p78
        %p201 = pneg %p75
        %p202 = scmp.lt.s32.totalorder %s21, 1
        %s203 = scalar_select %p202, %s21, 1
        %s204 = smul.addr %s203, 4
        %s205 = scalar_lea.vmem %s2, %s204
        %p206 = pneg %p104
        %p207 = pneg %p101
        %p208 = pneg %p132
        %p209 = pneg %p129
        %s210 = sand.u32 %s119, 1
        %s211 = scalar_lea.sflag [#allocation3], %s210
        %s212 = sand.u32 %s119, 1
        %s213 = smul.addr %s212, 16
        %s214 = scalar_lea.vmem [#allocation2], %s213
        %s215 = smul.u32 2, %s22
        %p216 = scmp.lt.s32.totalorder %s21, 1
        %s217 = scalar_select %p216, %s21, 1
        %p218 = scmp.lt.s32.totalorder %s215, 1
        %s219 = scalar_select %p218, %s215, 1
        %s220 = smul.addr %s217, 2
        %s221 = sadd.s32 %s219, %s220
        %s222 = smul.addr %s221, 8
        %s223 = scalar_lea.vmem %s0, %s222
        %s224 = smul.u32 2, %s22
        %p225 = scmp.lt.s32.totalorder %s21, 1
        %s226 = scalar_select %p225, %s21, 1
        %s227 = smul.addr %s226, 8
        %s228 = scalar_lea.vmem %s1, %s227
        %p229 = scmp.lt.s32.totalorder %s21, 1
        %s230 = scalar_select %p229, %s21, 1
        %s231 = smul.addr %s230, 4
        %s232 = scalar_lea.vmem %s2, %s231
        %s233 = smul.u32 2, %s22
        %v235 = vld [vmem:[%s223] sm:$0xff]
        %v236 = vld [vmem:[%s223 + $0x8] sm:$0xff]
        %v237 = vld [vmem:[%s228] sm:$0xff]
        %v238 = vld [vmem:[%s232] sm:$0xf]
        %v239 = vmul.f32 %v235, %v235
        %v240 = vmul.f32 %v236, %v236
        %vm241 = vcmask 64512
        %v242 = vsel %vm241, %v239, 0.0
        %243 = vadd.xlane.f32.xlu0 %v242
        %v244 = vpop.xlane.xlu0 %243
        %v245 = vsel %vm241, %v240, 0.0
        %246 = vadd.xlane.f32.xlu0 %v245
        %v247 = vpop.xlane.xlu0 %246
        %v248 = vmul.f32 %v237, %v237
        %v249 = vsel %vm241, %v248, 0.0
        %v250 = vrot.slane %v249, 4
        %v251 = vadd.f32 %v249, %v250
        %v252 = vrot.slane %v251, 2
        %v253 = vadd.f32 %v251, %v252
        %v254 = vrot.slane %v253, 1
        %v255 = vadd.f32 %v253, %v254
        %v256 = vadd.f32 %v244, %v255
        %v257 = vadd.f32 %v247, %v255
        %v259 = vsel %vm241, %v235, 0
        %v262 = vsel %vm241, %v236, 0
        %264 = vmatprep.subr.mxu0 0.0
        %265 = vmatpush1.msra.mxu0 %v237
        %266 = vmatprep.subr.mxu0 0.0
        %267 = vmatpush1.msra.mxu0 0.0
        %268 = vmatprep.subr.mxu0 0.0
        %269 = vmatpush1.msra.mxu0 0.0
        %270 = vmatprep.subr.mxu0 0.0
        %271 = vmatpush1.msra.mxu0 0.0
        %272 = vmatprep.subr.mxu0 0.0
        %273 = vmatpush1.msra.mxu0 0.0
        %274 = vmatprep.subr.mxu0 0.0
        %275 = vmatpush1.msra.mxu0 0.0
        %276 = vmatprep.subr.mxu0 0.0
        %277 = vmatpush1.msra.mxu0 0.0
        %278 = vmatprep.subr.mxu0 0.0
        %279 = vmatpush1.msra.mxu0 0.0
        %280 = vmatprep.subr.mxu0 0.0
        %281 = vmatpush1.msra.mxu0 0.0
        %282 = vmatprep.subr.mxu0 0.0
        %283 = vmatpush1.msra.mxu0 0.0
        %284 = vmatprep.subr.mxu0 0.0
        %285 = vmatpush1.msra.mxu0 0.0
        %286 = vmatprep.subr.mxu0 0.0
        %287 = vmatpush1.msra.mxu0 0.0
        %288 = vmatprep.subr.mxu0 0.0
        %289 = vmatpush1.msra.mxu0 0.0
        %290 = vmatprep.subr.mxu0 0.0
        %291 = vmatpush1.msra.mxu0 0.0
        %292 = vmatprep.subr.mxu0 0.0
        %293 = vmatpush1.msra.mxu0 0.0
        %294 = vmatprep.subr.mxu0 0.0
        %295 = vmatpush1.msra.mxu0 0.0
        %296 = vmatprep.subr.mxu0 0.0
        %297 = vmatpush1.msra.mxu0 0.0
        %298 = vmatprep.subr.mxu0 0.0
        %299 = vmatpush1.msra.mxu0 0.0
        %300 = vmatprep.subr.mxu0 0.0
        %301 = vmatpush1.msra.mxu0 0.0
        %302 = vmatprep.subr.mxu0 0.0
        %303 = vmatpush1.msra.mxu0 0.0
        %304 = vmatprep.subr.mxu0 0.0
        %305 = vmatpush1.msra.mxu0 0.0
        %306 = vmatprep.subr.mxu0 0.0
        %307 = vmatpush1.msra.mxu0 0.0
        %308 = vmatprep.subr.mxu0 0.0
        %309 = vmatpush1.msra.mxu0 0.0
        %310 = vmatprep.subr.mxu0 0.0
        %311 = vmatpush1.msra.mxu0 0.0
        %312 = vmatprep.subr.mxu0 0.0
        %313 = vmatpush1.msra.mxu0 0.0
        %314 = vmatprep.subr.mxu0 0.0
        %315 = vmatpush1.msra.mxu0 0.0
        %316 = vmatprep.subr.mxu0 0.0
        %317 = vmatpush1.msra.mxu0 0.0
        %318 = vmatprep.subr.mxu0 0.0
        %319 = vmatpush1.msra.mxu0 0.0
        %320 = vmatprep.subr.mxu0 0.0
        %321 = vmatpush1.msra.mxu0 0.0
        %322 = vmatprep.subr.mxu0 0.0
        %323 = vmatpush1.msra.mxu0 0.0
        %324 = vmatprep.subr.mxu0 0.0
        %325 = vmatpush1.msra.mxu0 0.0
        %326 = vmatprep.subr.mxu0 0.0
        %327 = vmatpush1.msra.mxu0 0.0
        %328 = vmatprep.mubr.f32.mxu0 0.0
        %329 = vmatmul.mubr.f32.gmra.mrb[0].mxu0 %v259
        %v330 = vpop.f32.mrb[0].mxu0
        %v331 = vadd.f32 0.0, %v330
        %v332 = vpop.f32.mrb[0].mxu0
        %333 = vmatprep.mubr.f32.mxu0 0.0
        %334 = vmatmul.mubr.f32.gmra.mrb[0].mxu0 %v262
        %v335 = vpop.f32.mrb[0].mxu0
        %v336 = vadd.f32 0.0, %v335
        %v337 = vpop.f32.mrb[0].mxu0
        %338 = vdwg.mxu0
        %v339 = vmul.f32 %v331, 2.0
        %v340 = vmul.f32 %v336, 2.0
        %v341 = vsub.f32 %v256, %v339
        %v342 = vsub.f32 %v257, %v340
        %v343 = vmax.f32 %v341, 0.0
        %v344 = vmax.f32 %v342, 0.0
        %v345 = vlaneseq
        %v346 = vand.u32 %v345, 127
        %vm347 = vcmp.lt.s32.totalorder %v346, 8
        %v348 = vsel %vm347, %v343, 1e+30
        %v349 = vsel %vm347, %v344, 1e+30
        %v350 = vsel %vm241, %v348, inf
        %351 = vmin.xlane.f32.xlu0 %v350
        %v352 = vpop.xlane.xlu0 %351
        %v353 = vsel %vm241, %v349, inf
        %354 = vmin.xlane.f32.xlu0 %v353
        %v355 = vpop.xlane.xlu0 %354
        %vm356 = vcmp.eq.f32.partialorder %v348, %v352
        %vm357 = vcmp.eq.f32.partialorder %v349, %v355
        %v358 = vsel %vm356, %v346, 1073741824
        %v359 = vsel %vm357, %v346, 1073741824
        %v360 = vsel %vm241, %v358, 2147483647
        %v361 = vand.u32 %v360, 65535
        %v362 = vshra.s32 %v360, 16
        %v363 = vcvt.s32.f32 %v361
        %v364 = vcvt.s32.f32 %v362
        %365 = vmin.xlane.f32.xlu0 %v364
        %v366 = vpop.xlane.xlu0 %365
        %vm367 = vcmp.eq.f32.partialorder %v364, %v366
        %v368 = vsel %vm367, %v363, inf
        %369 = vmin.xlane.f32.xlu0 %v368
        %v370 = vpop.xlane.xlu0 %369
        %v371 = vcvt.f32.s32 %v370
        %v372 = vcvt.f32.s32 %v366
        %v373 = vshll.u32 %v372, 16
        %v374 = vadd.s32 %v373, %v371
        %v375 = vsel %vm241, %v359, 2147483647
        %v376 = vand.u32 %v375, 65535
        %v377 = vshra.s32 %v375, 16
        %v378 = vcvt.s32.f32 %v376
        %v379 = vcvt.s32.f32 %v377
        %380 = vmin.xlane.f32.xlu0 %v379
        %v381 = vpop.xlane.xlu0 %380
        %vm382 = vcmp.eq.f32.partialorder %v379, %v381
        %v383 = vsel %vm382, %v378, inf
        %384 = vmin.xlane.f32.xlu0 %v383
        %v385 = vpop.xlane.xlu0 %384
        %v386 = vcvt.f32.s32 %v385
        %v387 = vcvt.f32.s32 %v381
        %v388 = vshll.u32 %v387, 16
        %v389 = vadd.s32 %v388, %v386
        %vm390 = vcmp.eq.s32.totalorder %v346, %v374
        %vm391 = vcmp.eq.s32.totalorder %v346, %v389
        %v392 = vadd.f32 %v352, 1e-08
        %v393 = vadd.f32 %v355, 1e-08
        %v394 = vrcp.pop %v392
        %v395 = vrcp.pop %v393
        %v396 = vsel %vm390, %v394, 0.0
        %v397 = vsel %vm391, %v395, 0.0
        %v398 = vadd.f32 %v396, 0.0
        %v399 = vadd.f32 %v397, 0.0
        %v400 = vsel %vm390, 1e+30, %v348
        %v401 = vsel %vm391, 1e+30, %v349
        %v402 = vsel %vm241, %v400, inf
        %403 = vmin.xlane.f32.xlu0 %v402
        %v404 = vpop.xlane.xlu0 %403
        %v405 = vsel %vm241, %v401, inf
        %406 = vmin.xlane.f32.xlu0 %v405
        %v407 = vpop.xlane.xlu0 %406
        %vm408 = vcmp.eq.f32.partialorder %v400, %v404
        %vm409 = vcmp.eq.f32.partialorder %v401, %v407
        %v410 = vsel %vm408, %v346, 1073741824
        %v411 = vsel %vm409, %v346, 1073741824
        %v412 = vsel %vm241, %v410, 2147483647
        %v413 = vand.u32 %v412, 65535
        %v414 = vshra.s32 %v412, 16
        %v415 = vcvt.s32.f32 %v413
        %v416 = vcvt.s32.f32 %v414
        %417 = vmin.xlane.f32.xlu0 %v416
        %v418 = vpop.xlane.xlu0 %417
        %vm419 = vcmp.eq.f32.partialorder %v416, %v418
        %v420 = vsel %vm419, %v415, inf
        %421 = vmin.xlane.f32.xlu0 %v420
        %v422 = vpop.xlane.xlu0 %421
        %v423 = vcvt.f32.s32 %v422
        %v424 = vcvt.f32.s32 %v418
        %v425 = vshll.u32 %v424, 16
        %v426 = vadd.s32 %v425, %v423
        %v427 = vsel %vm241, %v411, 2147483647
        %v428 = vand.u32 %v427, 65535
        %v429 = vshra.s32 %v427, 16
        %v430 = vcvt.s32.f32 %v428
        %v431 = vcvt.s32.f32 %v429
        %432 = vmin.xlane.f32.xlu0 %v431
        %v433 = vpop.xlane.xlu0 %432
        %vm434 = vcmp.eq.f32.partialorder %v431, %v433
        %v435 = vsel %vm434, %v430, inf
        %436 = vmin.xlane.f32.xlu0 %v435
        %v437 = vpop.xlane.xlu0 %436
        %v438 = vcvt.f32.s32 %v437
        %v439 = vcvt.f32.s32 %v433
        %v440 = vshll.u32 %v439, 16
        %v441 = vadd.s32 %v440, %v438
        %vm442 = vcmp.eq.s32.totalorder %v346, %v426
        %vm443 = vcmp.eq.s32.totalorder %v346, %v441
        %v444 = vadd.f32 %v404, 1e-08
        %v445 = vadd.f32 %v407, 1e-08
        %v446 = vrcp.pop %v444
        %v447 = vrcp.pop %v445
        %v448 = vsel %vm442, %v446, 0.0
        %v449 = vsel %vm443, %v447, 0.0
        %v450 = vadd.f32 %v398, %v448
        %v451 = vadd.f32 %v399, %v449
        %v452 = vsel %vm442, 1e+30, %v400
        %v453 = vsel %vm443, 1e+30, %v401
        %v454 = vsel %vm241, %v452, inf
        %455 = vmin.xlane.f32.xlu0 %v454
        %v456 = vpop.xlane.xlu0 %455
        %v457 = vsel %vm241, %v453, inf
        %458 = vmin.xlane.f32.xlu0 %v457
        %v459 = vpop.xlane.xlu0 %458
        %vm460 = vcmp.eq.f32.partialorder %v452, %v456
        %vm461 = vcmp.eq.f32.partialorder %v453, %v459
        %v462 = vsel %vm460, %v346, 1073741824
        %v463 = vsel %vm461, %v346, 1073741824
        %v464 = vsel %vm241, %v462, 2147483647
        %v465 = vand.u32 %v464, 65535
        %v466 = vshra.s32 %v464, 16
        %v467 = vcvt.s32.f32 %v465
        %v468 = vcvt.s32.f32 %v466
        %469 = vmin.xlane.f32.xlu0 %v468
        %v470 = vpop.xlane.xlu0 %469
        %vm471 = vcmp.eq.f32.partialorder %v468, %v470
        %v472 = vsel %vm471, %v467, inf
        %473 = vmin.xlane.f32.xlu0 %v472
        %v474 = vpop.xlane.xlu0 %473
        %v475 = vcvt.f32.s32 %v474
        %v476 = vcvt.f32.s32 %v470
        %v477 = vshll.u32 %v476, 16
        %v478 = vadd.s32 %v477, %v475
        %v479 = vsel %vm241, %v463, 2147483647
        %v480 = vand.u32 %v479, 65535
        %v481 = vshra.s32 %v479, 16
        %v482 = vcvt.s32.f32 %v480
        %v483 = vcvt.s32.f32 %v481
        %484 = vmin.xlane.f32.xlu0 %v483
        %v485 = vpop.xlane.xlu0 %484
        %vm486 = vcmp.eq.f32.partialorder %v483, %v485
        %v487 = vsel %vm486, %v482, inf
        %488 = vmin.xlane.f32.xlu0 %v487
        %v489 = vpop.xlane.xlu0 %488
        %v490 = vcvt.f32.s32 %v489
        %v491 = vcvt.f32.s32 %v485
        %v492 = vshll.u32 %v491, 16
        %v493 = vadd.s32 %v492, %v490
        %vm494 = vcmp.eq.s32.totalorder %v346, %v478
        %vm495 = vcmp.eq.s32.totalorder %v346, %v493
        %v496 = vadd.f32 %v456, 1e-08
        %v497 = vadd.f32 %v459, 1e-08
        %v498 = vrcp.pop %v496
        %v499 = vrcp.pop %v497
        %v500 = vsel %vm494, %v498, 0.0
        %v501 = vsel %vm495, %v499, 0.0
        %v502 = vadd.f32 %v450, %v500
        %v503 = vadd.f32 %v451, %v501
        %v504 = vsel %vm241, %v502, 0.0
        %505 = vadd.xlane.f32.xlu0 %v504
        %v506 = vpop.xlane.xlu0 %505
        %v507 = vsel %vm241, %v503, 0.0
        %508 = vadd.xlane.f32.xlu0 %v507
        %v509 = vpop.xlane.xlu0 %508
        %v510 = vadd.f32 %v506, 1e-30
        %v511 = vadd.f32 %v509, 1e-30
        %v512 = vrcp.pop %v510
        %v513 = vrcp.pop %v511
        %v514 = vmul.f32 %v502, %v512
        %v515 = vmul.f32 %v503, %v513
        %v516 = vpack.c.bf16 %v515, %v514
        %v518 = vsel %vm241, %v516, 0
        %vm520 = vcmask 1043456
        %v522 = vsel %vm520, %v238, 0
        %524 = vmatprep.subr.bf16.mxu0 0
        %525 = vmatpush1.bf16.msra.mxu0 %v522
        %526 = vmatprep.subr.bf16.mxu0 0
        %527 = vmatpush1.bf16.msra.mxu0 0
        %528 = vmatprep.subr.bf16.mxu0 0
        %529 = vmatpush1.bf16.msra.mxu0 0
        %530 = vmatprep.subr.bf16.mxu0 0
        %531 = vmatpush1.bf16.msra.mxu0 0
        %532 = vmatprep.subr.bf16.mxu0 0
        %533 = vmatpush1.bf16.msra.mxu0 0
        %534 = vmatprep.subr.bf16.mxu0 0
        %535 = vmatpush1.bf16.msra.mxu0 0
        %536 = vmatprep.subr.bf16.mxu0 0
        %537 = vmatpush1.bf16.msra.mxu0 0
        %538 = vmatprep.subr.bf16.mxu0 0
        %539 = vmatpush1.bf16.msra.mxu0 0
        %540 = vmatprep.subr.bf16.mxu0 0
        %541 = vmatpush1.bf16.msra.mxu0 0
        %542 = vmatprep.subr.bf16.mxu0 0
        %543 = vmatpush1.bf16.msra.mxu0 0
        %544 = vmatprep.subr.bf16.mxu0 0
        %545 = vmatpush1.bf16.msra.mxu0 0
        %546 = vmatprep.subr.bf16.mxu0 0
        %547 = vmatpush1.bf16.msra.mxu0 0
        %548 = vmatprep.subr.bf16.mxu0 0
        %549 = vmatpush1.bf16.msra.mxu0 0
        %550 = vmatprep.subr.bf16.mxu0 0
        %551 = vmatpush1.bf16.msra.mxu0 0
        %552 = vmatprep.subr.bf16.mxu0 0
        %553 = vmatpush1.bf16.msra.mxu0 0
        %554 = vmatprep.subr.bf16.mxu0 0
        %555 = vmatpush1.bf16.msra.mxu0 0
        %556 = vmatprep.mubr.bf16.mxu0 0
        %557 = vmatmul.mubr.bf16.gmra.mrb[0].mxu0 %v518
        %v558 = vpop.f32.mrb[0].mxu0
        %v559 = vadd.f32 0.0, %v558
        %v560 = vpop.f32.mrb[0].mxu0
        %v561 = vpop.f32.mrb[0].mxu0
        %v562 = vadd.f32 0.0, %v561
        %v563 = vpop.f32.mrb[0].mxu0
        %564 = vdwg.mxu0
        %vm565 = vcmask 523264
        %566 = vst.msk [vmem:[%s214] sm:$0xff] %vm565, %v559
        %567 = vst.msk [vmem:[%s214 + $0x8] sm:$0xff] %vm565, %v562
        %s568 = sand.u32 %s119, 1
        %s569 = scalar_lea.sflag [#allocation3], %s568
        %s570 = sand.u32 %s119, 1
        %s571 = smul.addr %s570, 16
        %s572 = scalar_lea.vmem [#allocation2], %s571
        // Predicated region
        $region33: #{tpu_custom_call.1} parent=31 // pred_check
          %p573 = pneg %p129
        $region34: #{tpu_custom_call.1} parent=31 // pred_check_branch
          %575 = sbr.rel (%p573) target = $region36
        $region35: #{tpu_custom_call.1} parent=31 // pred_region
          %s576 = smul.u32 2, %s22
          %s578 = ssub.s32 256, 256
          %579 = vsyncadd %s569, %s578
          %s580 = smul.addr %s21, 2
          %s581 = sadd.s32 %s576, %s580
          %s582 = smul.addr %s581, 128
          %s583 = scalar_lea.hbm %s3, %s582
          %s584 = sshll.u32 %s572, 4
          %s585 = int_to_ptr.vmem [resolvable:$true] %s584
          %590 = dma.vmem_to_hbm [thread:$0]  %s585, 256, %s583, %s569, 128, 128, 8
        $region36: #{tpu_custom_call.1} parent=31 // pred_fallthru
          _
      $region32: #{tpu_custom_call.1} parent=5 // pred_fallthru
        _
      %p591 = scmp.le.s32.totalorder 2, %s12
      // Predicated region
      $region37: #{tpu_custom_call.1} parent=5 // pred_check
        %p592 = pneg %p591
      $region38: #{tpu_custom_call.1} parent=5 // pred_check_branch
        %594 = sbr.rel (%p592) target = $region40
      $region39: #{tpu_custom_call.1} parent=5 // pred_region
        %s595 = ssub.s32 %s12, 2
        // Predicated region
        $region41: #{tpu_custom_call.1} parent=39 // pred_check
          %p596 = pneg %p135
        $region42: #{tpu_custom_call.1} parent=39 // pred_check_branch
          %598 = sbr.rel (%p596) target = $region44
        $region43: #{tpu_custom_call.1} parent=39 // pred_region
          %s599 = sand.u32 %s120, 1
          %s600 = scalar_lea.sflag [#allocation3], %s599
          %s601 = sand.u32 %s120, 1
          %s602 = smul.addr %s601, 16
          %s603 = scalar_lea.vmem [#allocation2], %s602
          %604 = dma.done %s600, 256
        $region44: #{tpu_custom_call.1} parent=39 // pred_fallthru
          _
      $region40: #{tpu_custom_call.1} parent=5 // pred_fallthru
        _
    $region6: #{tpu_custom_call.1} parent=1 // loop_footer
      %s16 = sadd.s32 1, %s12
    $region7: #{tpu_custom_call.1} parent=1 // loop_footer_branch
      %11 = sbr.rel target = $region3
    $region8: #{tpu_custom_call.1} parent=1 // loop_exit
      _
    %605 = vsyncpa [#allocation3], 1
    %s606 = scalar_lea.sflag [#allocation3], 1
    %607 = vsyncpa %s606, 1

</llo_original>
